<compile_context>
chip_gen: v7x
topology: tpu7x:2x2x1
jax: 0.10.0
libtpu: 0.0.40
codegen_flags: <defaults>
</compile_context>

<pallas_src>
import math

import jax
import jax.numpy as jnp
from jax.experimental import pallas as pl
from jax.experimental.pallas import tpu as pltpu

LOG_STD_MAX = 2.0
LOG_STD_MIN = -20.0

# Module-consistent sizes (small MLP trunk + tiny heads).
OBS_DIM = 8
HIDDEN = (32, 32)
ACT_DIM = 4
ACT_LIMIT = 2.0

H1, H2 = HIDDEN
HEAD_W = 2 * ACT_DIM                  # fused [mu | log_std] head width

# ---- packed parameter slab (transposed weights): one (PROWS, PCOLS) f32 ----
PCOLS = max(OBS_DIM, H1, H2)          # 32
R_W1T = 0                             # rows [  0, 32): W1^T (H1, OBS_DIM)
R_W2T = R_W1T + H1                    # rows [ 32, 64): W2^T (H2, H1)
R_WHT = R_W2T + H2                    # rows [ 64, 72): Wh^T (HEAD_W, H2)  [mu rows 0:4, log_std rows 4:8]
R_B1 = R_WHT + HEAD_W                 # rows [ 72,104): b1 in col 0   (8-row aligned)
R_B2 = R_B1 + H1                      # rows [104,136): b2 in col 0   (8-row aligned)
R_BH = R_B2 + H2                      # rows [136,144): b_heads col 0 (8-row aligned)
PROWS = R_BH + HEAD_W                 # 144 (multiple of 8)

# ---- packed output layout (feature-major, batch on lanes) ----
# rows [0:4]  = act_limit * tanh(pi)
# rows [4:8]  = tanh(mu)
# rows [8:12] = std
# row  [12]   = logp_pi
OUT_ROWS = 3 * ACT_DIM + 1            # 13

BATCH = 256


def _actor_kernel(obs_ref, eps_ref, params_ref, out_ref):
    x = obs_ref[...]                                      # (OBS_DIM, tile_b)
    eps = eps_ref[...]                                    # (ACT_DIM, tile_b)

    # Static views into the resident parameter slab (no extra DMAs).
    w1t = params_ref[R_W1T:R_W1T + H1, :OBS_DIM]          # (32, 8)
    w2t = params_ref[R_W2T:R_W2T + H2, :H1]               # (32, 32)
    wht = params_ref[R_WHT:R_WHT + HEAD_W, :H2]           # (8, 32)
    b1 = params_ref[R_B1:R_B1 + H1, 0:1]                  # (32, 1) -> lane-broadcast on add
    b2 = params_ref[R_B2:R_B2 + H2, 0:1]                  # (32, 1)
    bh = params_ref[R_BH:R_BH + HEAD_W, 0:1]              # (8, 1)

    # --- MLP trunk: Linear -> ReLU -> Linear -> ReLU (output_activation=activation) ---
    h1 = jnp.maximum(jnp.dot(w1t, x, preferred_element_type=jnp.float32) + b1, 0.0)   # (32, tile_b)
    h2 = jnp.maximum(jnp.dot(w2t, h1, preferred_element_type=jnp.float32) + b2, 0.0)  # (32, tile_b)

    # --- fused heads: one matmul -> rows 0:4 = mu, rows 4:8 = log_std ---
    heads = jnp.dot(wht, h2, preferred_element_type=jnp.float32) + bh                  # (8, tile_b)
    mu = heads[0:ACT_DIM, :]
    log_std = jnp.clip(heads[ACT_DIM:HEAD_W, :], LOG_STD_MIN, LOG_STD_MAX)
    std = jnp.exp(log_std)

    # --- reparameterized sample: Normal.rsample == mu + std * eps ---
    pi = mu + std * eps                                   # (ACT_DIM, tile_b)

    # --- Normal log-prob summed over action dim.
    #     ((pi - mu)/std)**2 == eps**2 by construction: no divide needed. ---
    logp = (jnp.sum(-0.5 * eps * eps - log_std, axis=0, keepdims=True)
            - 0.5 * ACT_DIM * math.log(2.0 * math.pi))    # (1, tile_b)

    # --- tanh-squash correction: 2*(log 2 - pi - softplus(-2*pi)), stable softplus ---
    z = -2.0 * pi
    softplus = jnp.maximum(z, 0.0) + jnp.log1p(jnp.exp(-jnp.abs(z)))
    corr = 2.0 * (math.log(2.0) - pi - softplus)
    logp = logp - jnp.sum(corr, axis=0, keepdims=True)    # (1, tile_b)

    # --- lane-dense stores (full tile_b lanes each, logp in a single row) ---
    out_ref[0:ACT_DIM, :] = ACT_LIMIT * jnp.tanh(pi)
    out_ref[ACT_DIM:2 * ACT_DIM, :] = jnp.tanh(mu)
    out_ref[2 * ACT_DIM:3 * ACT_DIM, :] = std
    out_ref[3 * ACT_DIM:OUT_ROWS, :] = logp


def pack_params(w1, b1, w2, b2, wmu, bmu, wls, bls):
    """Pack all Linear parameters (stored (in, out)) transposed into one f32 slab."""
    wh = jnp.concatenate([wmu, wls], axis=1)              # (H2, HEAD_W)
    bh = jnp.concatenate([bmu, bls], axis=1)              # (1, HEAD_W)
    slab = jnp.zeros((PROWS, PCOLS), jnp.float32)
    slab = slab.at[R_W1T:R_W1T + H1, :OBS_DIM].set(w1.T)
    slab = slab.at[R_W2T:R_W2T + H2, :H1].set(w2.T)
    slab = slab.at[R_WHT:R_WHT + HEAD_W, :H2].set(wh.T)
    slab = slab.at[R_B1:R_B1 + H1, 0].set(b1.reshape(-1))
    slab = slab.at[R_B2:R_B2 + H2, 0].set(b2.reshape(-1))
    slab = slab.at[R_BH:R_BH + HEAD_W, 0].set(bh.reshape(-1))
    return slab


def squashed_gaussian_actor_forward(obs, params_slab, eps, *, tile_b=None):
    """Matches SquashedGaussianMLPActor.forward(obs, deterministic=False,
    with_logprob=True): returns (pi_action, logp_pi, None, tanh(mu), std)."""
    B = obs.shape[0]
    # One fat tile by default (grid=(1,)); only tile for very large batches
    # (tile_b must then be a multiple of 128 lanes, e.g. B//2 on v7x megacore).
    if tile_b is None:
        tile_b = B
    assert B % tile_b == 0 and (tile_b == B or tile_b % 128 == 0), \
        "tile_b must divide B and be a multiple of 128 (or equal B)"
    grid = (B // tile_b,)

    # Layout plumbing (batch-on-lanes) lives in the wrapper, not the kernel.
    obs_t = obs.T                                         # (OBS_DIM, B)
    eps_t = eps.T                                         # (ACT_DIM, B)

    packed = pl.pallas_call(
        _actor_kernel,
        out_shape=jax.ShapeDtypeStruct((OUT_ROWS, B), jnp.float32),
        grid_spec=pltpu.PrefetchScalarGridSpec(
            num_scalar_prefetch=0,
            grid=grid,
            in_specs=[
                pl.BlockSpec((OBS_DIM, tile_b), lambda i: (0, i)),   # obs^T: tiled over lanes
                pl.BlockSpec((ACT_DIM, tile_b), lambda i: (0, i)),   # eps^T: tiled over lanes
                pl.BlockSpec((PROWS, PCOLS), lambda i: (0, 0)),      # params: VMEM-resident
            ],
            out_specs=pl.BlockSpec((OUT_ROWS, tile_b), lambda i: (0, i)),
        ),
        compiler_params=pltpu.CompilerParams(
            dimension_semantics=("parallel",),   # no-op at grid=(1,); shards lanes across v7x TCs if tiled
        ),
    )(obs_t, eps_t, params_slab)

    pi_action = packed[0:ACT_DIM, :].T
    tanh_mu = packed[ACT_DIM:2 * ACT_DIM, :].T
    std = packed[2 * ACT_DIM:3 * ACT_DIM, :].T
    logp_pi = packed[3 * ACT_DIM, :]
    # epsilon is None in the with_logprob=True branch of the module.
    return pi_action, logp_pi, None, tanh_mu, std


def init_params(key):
    """Deterministic synthetic params matching nn.Linear shapes (stored (in, out))."""
    def linear(key, fan_in, fan_out):
        kw, kb = jax.random.split(key)
        bound = 1.0 / math.sqrt(fan_in)
        w = jax.random.uniform(kw, (fan_in, fan_out), jnp.float32, -bound, bound)
        b = jax.random.uniform(kb, (1, fan_out), jnp.float32, -bound, bound)
        return w, b

    k1, k2, k3, k4 = jax.random.split(key, 4)
    w1, b1 = linear(k1, OBS_DIM, H1)
    w2, b2 = linear(k2, H1, H2)
    wmu, bmu = linear(k3, H2, ACT_DIM)
    wls, bls = linear(k4, H2, ACT_DIM)
    return (w1, b1, w2, b2, wmu, bmu, wls, bls)


def reference_forward(obs, raw_params, eps):
    """Pure-JAX reference mirroring the PyTorch module (with_logprob=True)."""
    w1, b1, w2, b2, wmu, bmu, wls, bls = raw_params
    h1 = jax.nn.relu(obs @ w1 + b1)
    h2 = jax.nn.relu(h1 @ w2 + b2)
    mu = h2 @ wmu + bmu
    log_std = jnp.clip(h2 @ wls + bls, LOG_STD_MIN, LOG_STD_MAX)
    std = jnp.exp(log_std)
    pi = mu + std * eps
    logp = jnp.sum(-0.5 * ((pi - mu) / std) ** 2 - log_std
                   - 0.5 * math.log(2.0 * math.pi), axis=-1)
    logp = logp - jnp.sum(2.0 * (math.log(2.0) - pi - jax.nn.softplus(-2.0 * pi)), axis=-1)
    return ACT_LIMIT * jnp.tanh(pi), logp, jnp.tanh(mu), std


if __name__ == "__main__":
    key = jax.random.PRNGKey(0)
    k_params, k_obs, k_eps = jax.random.split(key, 3)

    raw_params = init_params(k_params)
    params_slab = pack_params(*raw_params)

    obs = jax.random.normal(k_obs, (BATCH, OBS_DIM), jnp.float32)
    # Sampling noise generated in glue (JAX PRNG) so the kernel stays bit-exact
    # against the reference.
    # TODO(synk): could instead be drawn in-kernel via pltpu.prng_seed/stateful_normal
    # to drop this DMA (changes the random stream -> needs a statistical test).
    eps = jax.random.normal(k_eps, (BATCH, ACT_DIM), jnp.float32)

    pi_action, logp_pi, epsilon, tanh_mu, std = jax.block_until_ready(
        squashed_gaussian_actor_forward(obs, params_slab, eps)
    )

    # Shape / sanity checks.
    assert pi_action.shape == (BATCH, ACT_DIM)
    assert logp_pi.shape == (BATCH,)
    assert epsilon is None
    assert tanh_mu.shape == (BATCH, ACT_DIM)
    assert std.shape == (BATCH, ACT_DIM)
    assert bool(jnp.all(jnp.isfinite(pi_action)))
    assert bool(jnp.all(jnp.isfinite(logp_pi)))

    # Numerical check against a pure-JAX reference of the PyTorch forward.
    ref_pi, ref_logp, ref_tanh_mu, ref_std = reference_forward(obs, raw_params, eps)
    assert bool(jnp.allclose(pi_action, ref_pi, rtol=2e-4, atol=2e-4))
    assert bool(jnp.allclose(logp_pi, ref_logp, rtol=2e-4, atol=2e-4))
    assert bool(jnp.allclose(tanh_mu, ref_tanh_mu, rtol=2e-4, atol=2e-4))
    assert bool(jnp.allclose(std, ref_std, rtol=2e-4, atol=2e-4))

    print("KERNEL_OK")
</pallas_src>

<mosaic_0001>
module attributes {stable_mosaic.version = 11 : i64} {
  func.func @_actor_kernel(%arg0: i32, %arg1: memref<8x256xf32, #tpu.memory_space<vmem>>, %arg2: memref<4x256xf32, #tpu.memory_space<vmem>>, %arg3: memref<144x32xf32, #tpu.memory_space<vmem>>, %arg4: memref<13x256xf32, #tpu.memory_space<vmem>>) attributes {dimension_semantics = [#tpu.dimension_semantics<parallel>], iteration_bounds = array<i64: 1>, scalar_prefetch = 0 : i64, scratch_operands = 0 : i64, tpu.core_type = #tpu.core_type<tc>, window_params = [{transform_indices = @transform_0, window_bounds = array<i64: 8, 256>}, {transform_indices = @transform_1, window_bounds = array<i64: 4, 256>}, {pipeline_mode = #tpu.pipeline_mode<synchronous>, transform_indices = @transform_2, window_bounds = array<i64: 144, 32>}, {transform_indices = @transform_3, window_bounds = array<i64: 13, 256>}]} {
    %c0 = arith.constant 0 : index
    %c0_0 = arith.constant 0 : index
    %0 = vector.load %arg1[%c0, %c0_0] : memref<8x256xf32, #tpu.memory_space<vmem>>, vector<8x256xf32>
    %c0_1 = arith.constant 0 : index
    %c0_2 = arith.constant 0 : index
    %1 = vector.load %arg2[%c0_1, %c0_2] : memref<4x256xf32, #tpu.memory_space<vmem>>, vector<4x256xf32>
    %c0_3 = arith.constant 0 : index
    %c0_4 = arith.constant 0 : index
    %2 = vector.load %arg3[%c0_3, %c0_4] : memref<144x32xf32, #tpu.memory_space<vmem>>, vector<32x8xf32>
    %c32 = arith.constant 32 : index
    %c0_5 = arith.constant 0 : index
    %3 = vector.load %arg3[%c32, %c0_5] : memref<144x32xf32, #tpu.memory_space<vmem>>, vector<32x32xf32>
    %c64 = arith.constant 64 : index
    %c0_6 = arith.constant 0 : index
    %4 = vector.load %arg3[%c64, %c0_6] : memref<144x32xf32, #tpu.memory_space<vmem>>, vector<8x32xf32>
    %c72 = arith.constant 72 : index
    %c0_7 = arith.constant 0 : index
    %5 = vector.load %arg3[%c72, %c0_7] : memref<144x32xf32, #tpu.memory_space<vmem>>, vector<32x1xf32>
    %c104 = arith.constant 104 : index
    %c0_8 = arith.constant 0 : index
    %6 = vector.load %arg3[%c104, %c0_8] : memref<144x32xf32, #tpu.memory_space<vmem>>, vector<32x1xf32>
    %c136 = arith.constant 136 : index
    %c0_9 = arith.constant 0 : index
    %7 = vector.load %arg3[%c136, %c0_9] : memref<144x32xf32, #tpu.memory_space<vmem>>, vector<8x1xf32>
    %cst = arith.constant dense<0.000000e+00> : vector<32x256xf32>
    %8 = tpu.matmul %2, %0, %cst {dimension_numbers = #tpu.dot_dimension_numbers<[1], [0], [0], [1], [0, 0, 1, 1], [], []>} : vector<32x8xf32>, vector<8x256xf32>, vector<32x256xf32> -> vector<32x256xf32>
    %9 = vector.broadcast %5 : vector<32x1xf32> to vector<32x256xf32>
    %10 = arith.addf %8, %9 : vector<32x256xf32>
    %cst_10 = arith.constant 0.000000e+00 : f32
    %11 = vector.broadcast %cst_10 : f32 to vector<32x256xf32>
    %12 = arith.maximumf %10, %11 : vector<32x256xf32>
    %cst_11 = arith.constant dense<0.000000e+00> : vector<32x256xf32>
    %13 = tpu.matmul %3, %12, %cst_11 {dimension_numbers = #tpu.dot_dimension_numbers<[1], [0], [0], [1], [0, 0, 1, 1], [], []>} : vector<32x32xf32>, vector<32x256xf32>, vector<32x256xf32> -> vector<32x256xf32>
    %14 = vector.broadcast %6 : vector<32x1xf32> to vector<32x256xf32>
    %15 = arith.addf %13, %14 : vector<32x256xf32>
    %cst_12 = arith.constant 0.000000e+00 : f32
    %16 = vector.broadcast %cst_12 : f32 to vector<32x256xf32>
    %17 = arith.maximumf %15, %16 : vector<32x256xf32>
    %cst_13 = arith.constant dense<0.000000e+00> : vector<8x256xf32>
    %18 = tpu.matmul %4, %17, %cst_13 {dimension_numbers = #tpu.dot_dimension_numbers<[1], [0], [0], [1], [0, 0, 1, 1], [], []>} : vector<8x32xf32>, vector<32x256xf32>, vector<8x256xf32> -> vector<8x256xf32>
    %19 = vector.broadcast %7 : vector<8x1xf32> to vector<8x256xf32>
    %20 = arith.addf %18, %19 : vector<8x256xf32>
    %21 = vector.extract_strided_slice %20 {offsets = [0, 0], sizes = [4, 256], strides = [1, 1]} : vector<8x256xf32> to vector<4x256xf32>
    %22 = vector.extract_strided_slice %20 {offsets = [4, 0], sizes = [4, 256], strides = [1, 1]} : vector<8x256xf32> to vector<4x256xf32>
    %cst_14 = arith.constant -2.000000e+01 : f32
    %cst_15 = arith.constant 2.000000e+00 : f32
    %23 = vector.broadcast %cst_14 : f32 to vector<4x256xf32>
    %24 = arith.maximumf %23, %22 : vector<4x256xf32>
    %25 = vector.broadcast %cst_15 : f32 to vector<4x256xf32>
    %26 = arith.minimumf %25, %24 : vector<4x256xf32>
    %27 = math.exp %26 : vector<4x256xf32>
    %28 = arith.mulf %27, %1 : vector<4x256xf32>
    %29 = arith.addf %21, %28 : vector<4x256xf32>
    %cst_16 = arith.constant -5.000000e-01 : f32
    %30 = vector.broadcast %cst_16 : f32 to vector<4x256xf32>
    %31 = arith.mulf %30, %1 : vector<4x256xf32>
    %32 = arith.mulf %31, %1 : vector<4x256xf32>
    %33 = arith.subf %32, %26 : vector<4x256xf32>
    %cst_17 = arith.constant dense<0.000000e+00> : vector<256xf32>
    %34 = vector.multi_reduction <add>, %33, %cst_17 [0] : vector<4x256xf32> to vector<256xf32>
    %35 = vector.shape_cast %34 : vector<256xf32> to vector<1x256xf32>
    %cst_18 = arith.constant 3.67575407 : f32
    %36 = vector.broadcast %cst_18 : f32 to vector<1x256xf32>
    %37 = arith.subf %35, %36 : vector<1x256xf32>
    %cst_19 = arith.constant -2.000000e+00 : f32
    %38 = vector.broadcast %cst_19 : f32 to vector<4x256xf32>
    %39 = arith.mulf %38, %29 : vector<4x256xf32>
    %cst_20 = arith.constant 0.000000e+00 : f32
    %40 = vector.broadcast %cst_20 : f32 to vector<4x256xf32>
    %41 = arith.maximumf %39, %40 : vector<4x256xf32>
    %42 = math.absf %39 : vector<4x256xf32>
    %cst_21 = arith.constant 0.000000e+00 : f32
    %43 = vector.broadcast %cst_21 : f32 to vector<4x256xf32>
    %44 = arith.subf %43, %42 : vector<4x256xf32>
    %45 = math.exp %44 : vector<4x256xf32>
    %46 = math.log1p %45 : vector<4x256xf32>
    %47 = arith.addf %41, %46 : vector<4x256xf32>
    %cst_22 = arith.constant 0.693147182 : f32
    %48 = vector.broadcast %cst_22 : f32 to vector<4x256xf32>
    %49 = arith.subf %48, %29 : vector<4x256xf32>
    %50 = arith.subf %49, %47 : vector<4x256xf32>
    %cst_23 = arith.constant 2.000000e+00 : f32
    %51 = vector.broadcast %cst_23 : f32 to vector<4x256xf32>
    %52 = arith.mulf %51, %50 : vector<4x256xf32>
    %cst_24 = arith.constant dense<0.000000e+00> : vector<256xf32>
    %53 = vector.multi_reduction <add>, %52, %cst_24 [0] : vector<4x256xf32> to vector<256xf32>
    %54 = vector.shape_cast %53 : vector<256xf32> to vector<1x256xf32>
    %55 = arith.subf %37, %54 : vector<1x256xf32>
    %56 = math.tanh %29 : vector<4x256xf32>
    %cst_25 = arith.constant 2.000000e+00 : f32
    %57 = vector.broadcast %cst_25 : f32 to vector<4x256xf32>
    %58 = arith.mulf %57, %56 : vector<4x256xf32>
    %c0_26 = arith.constant 0 : index
    %c0_27 = arith.constant 0 : index
    %59 = vector.load %arg4[%c0_26, %c0_27] : memref<13x256xf32, #tpu.memory_space<vmem>>, vector<4x256xf32>
    tpu.vector_store %arg4[%c0_26, %c0_27], %58 {strides = array<i32>} : memref<13x256xf32, #tpu.memory_space<vmem>>, vector<4x256xf32>,
    %60 = math.tanh %21 : vector<4x256xf32>
    %c4 = arith.constant 4 : index
    %c0_28 = arith.constant 0 : index
    %61 = vector.load %arg4[%c4, %c0_28] : memref<13x256xf32, #tpu.memory_space<vmem>>, vector<4x256xf32>
    tpu.vector_store %arg4[%c4, %c0_28], %60 {strides = array<i32>} : memref<13x256xf32, #tpu.memory_space<vmem>>, vector<4x256xf32>,
    %c8 = arith.constant 8 : index
    %c0_29 = arith.constant 0 : index
    %62 = vector.load %arg4[%c8, %c0_29] : memref<13x256xf32, #tpu.memory_space<vmem>>, vector<4x256xf32>
    tpu.vector_store %arg4[%c8, %c0_29], %27 {strides = array<i32>} : memref<13x256xf32, #tpu.memory_space<vmem>>, vector<4x256xf32>,
    %c12 = arith.constant 12 : index
    %c0_30 = arith.constant 0 : index
    %63 = vector.load %arg4[%c12, %c0_30] : memref<13x256xf32, #tpu.memory_space<vmem>>, vector<1x256xf32>
    tpu.vector_store %arg4[%c12, %c0_30], %55 {strides = array<i32>} : memref<13x256xf32, #tpu.memory_space<vmem>>, vector<1x256xf32>,
    return
  }
  func.func @transform_0(%arg0: i32) -> (i32, i32) {
    %c0_i32 = arith.constant 0 : i32
    %c0_i32_0 = arith.constant 0 : i32
    return %c0_i32, %arg0 : i32, i32
  }
  func.func @transform_1(%arg0: i32) -> (i32, i32) {
    %c0_i32 = arith.constant 0 : i32
    %c0_i32_0 = arith.constant 0 : i32
    return %c0_i32, %arg0 : i32, i32
  }
  func.func @transform_2(%arg0: i32) -> (i32, i32) {
    %c0_i32 = arith.constant 0 : i32
    %c0_i32_0 = arith.constant 0 : i32
    %c0_i32_1 = arith.constant 0 : i32
    return %c0_i32, %c0_i32_0 : i32, i32
  }
  func.func @transform_3(%arg0: i32) -> (i32, i32) {
    %c0_i32 = arith.constant 0 : i32
    %c0_i32_0 = arith.constant 0 : i32
    return %c0_i32, %arg0 : i32, i32
  }
}

</mosaic_0001>

<llo_original>
// kernel: tpu_custom_call.1
$region0: #{tpu_custom_call.1}
  #allocation0 [shape = 'u32[]', space=smem, size = 0x4, offset = 0x4, fixed_abs, tag = 'smem constant byte address 0x4 - core index']
  #allocation1 [shape = 'u32[144,128]{1,0:T(1,128)}', space=vmem, size = 0x12000, scoped, tag = 'internal scratch']
  %s0 = inlined_call_operand.vmem [shape: f32[8,256], index: 0, kind: input, shape index: {}]
  %s1 = inlined_call_operand.vmem [shape: f32[4,256], index: 1, kind: input, shape index: {}]
  %s2 = inlined_call_operand.vmem [shape: f32[144,32], index: 2, kind: input, shape index: {}]
  %s3 = inlined_call_operand.hbm [shape: f32[13,256], index: 3, kind: output, shape index: {}]
  %s4 = sld [smem:[#allocation0]]
  $region22: #{tpu_custom_call.1} parent=0
    _
  %s6 = ssub.s32 1, %s4
  %s7 = scalar_select 0, %s6, %s4
  $region1: #{tpu_custom_call.1} parent=0
    #allocation2 [shape = 'u8[16384]{0}', space=vmem, size = 0x4000, scoped, tag = 'output window, operand 0, single buffered']
    #allocation3 [shape = 's32[1]{0}', space=sflag, size = 0x4, scoped, tag = 'scoped memory for tpu_custom_call.1']
    %8 = vsyncpa [#allocation3], 0
    // Predicated region
    $region2: #{tpu_custom_call.1} parent=1 // pred_check
      _
    $region3: #{tpu_custom_call.1} parent=1 // pred_check_branch
      %10 = sbr.rel (0) target = $region5
    $region4: #{tpu_custom_call.1} parent=1 // pred_region
      _
    $region5: #{tpu_custom_call.1} parent=1 // pred_fallthru
      _
    // Predicated region
    $region6: #{tpu_custom_call.1} parent=1 // pred_check
      _
    $region7: #{tpu_custom_call.1} parent=1 // pred_check_branch
      %12 = sbr.rel (0) target = $region9
    $region8: #{tpu_custom_call.1} parent=1 // pred_region
      _
    $region9: #{tpu_custom_call.1} parent=1 // pred_fallthru
      _
    // Predicated region
    $region10: #{tpu_custom_call.1} parent=1 // pred_check
      _
    $region11: #{tpu_custom_call.1} parent=1 // pred_check_branch
      %14 = sbr.rel (0) target = $region13
    $region12: #{tpu_custom_call.1} parent=1 // pred_region
      _
    $region13: #{tpu_custom_call.1} parent=1 // pred_fallthru
      _
    %v15 = vld [vmem:[%s0] sm:$0xff]
    %v16 = vld [vmem:[%s0 + $0x8] sm:$0xff]
    %v17 = vld [vmem:[%s1] sm:$0xff]
    %v18 = vld [vmem:[%s2] sm:$0xff]
    %v19 = vld [vmem:[%s2 + $0x8] sm:$0xff]
    %v20 = vld [vmem:[%s2 + $0x10] sm:$0xff]
    %v21 = vld [vmem:[%s2 + $0x18] sm:$0xff]
    %v22 = vld [vmem:[%s2 + $0x20] sm:$0xff]
    %v23 = vld [vmem:[%s2 + $0x28] sm:$0xff]
    %v24 = vld [vmem:[%s2 + $0x30] sm:$0xff]
    %v25 = vld [vmem:[%s2 + $0x38] sm:$0xff]
    %v26 = vld [vmem:[%s2 + $0x40] sm:$0xff]
    %v27 = vld [vmem:[%s2 + $0x48] sm:$0xff]
    %v28 = vld [vmem:[%s2 + $0x50] sm:$0xff]
    %v29 = vld [vmem:[%s2 + $0x58] sm:$0xff]
    %v30 = vld [vmem:[%s2 + $0x60] sm:$0xff]
    %v31 = vld [vmem:[%s2 + $0x68] sm:$0xff]
    %v32 = vld [vmem:[%s2 + $0x70] sm:$0xff]
    %v33 = vld [vmem:[%s2 + $0x78] sm:$0xff]
    %v34 = vld [vmem:[%s2 + $0x80] sm:$0xff]
    %v35 = vld [vmem:[%s2 + $0x88] sm:$0xff]
    %37 = vset.pattern.permute.xlu0 0
    %38 = vperm.xlu0 %37, %v27
    %v39 = vpop.permute.xlu0 %38
    %42 = vset.pattern.permute.xlu0 0
    %43 = vperm.xlu0 %42, %v28
    %v44 = vpop.permute.xlu0 %43
    %47 = vset.pattern.permute.xlu0 0
    %48 = vperm.xlu0 %47, %v29
    %v49 = vpop.permute.xlu0 %48
    %52 = vset.pattern.permute.xlu0 0
    %53 = vperm.xlu0 %52, %v30
    %v54 = vpop.permute.xlu0 %53
    %vm56 = vcmask 64512
    %v58 = vsel %vm56, %v18, 0
    %v61 = vsel %vm56, %v19, 0
    %v64 = vsel %vm56, %v20, 0
    %v67 = vsel %vm56, %v21, 0
    %69 = vmatprep.subr.mxu0 %v16
    %70 = vmatpush1.msra.mxu0 %v15
    %71 = vmatprep.subr.mxu0 0.0
    %72 = vmatpush1.msra.mxu0 0.0
    %73 = vmatprep.subr.mxu0 0.0
    %74 = vmatpush1.msra.mxu0 0.0
    %75 = vmatprep.subr.mxu0 0.0
    %76 = vmatpush1.msra.mxu0 0.0
    %77 = vmatprep.subr.mxu0 0.0
    %78 = vmatpush1.msra.mxu0 0.0
    %79 = vmatprep.subr.mxu0 0.0
    %80 = vmatpush1.msra.mxu0 0.0
    %81 = vmatprep.subr.mxu0 0.0
    %82 = vmatpush1.msra.mxu0 0.0
    %83 = vmatprep.subr.mxu0 0.0
    %84 = vmatpush1.msra.mxu0 0.0
    %85 = vmatprep.subr.mxu0 0.0
    %86 = vmatpush1.msra.mxu0 0.0
    %87 = vmatprep.subr.mxu0 0.0
    %88 = vmatpush1.msra.mxu0 0.0
    %89 = vmatprep.subr.mxu0 0.0
    %90 = vmatpush1.msra.mxu0 0.0
    %91 = vmatprep.subr.mxu0 0.0
    %92 = vmatpush1.msra.mxu0 0.0
    %93 = vmatprep.subr.mxu0 0.0
    %94 = vmatpush1.msra.mxu0 0.0
    %95 = vmatprep.subr.mxu0 0.0
    %96 = vmatpush1.msra.mxu0 0.0
    %97 = vmatprep.subr.mxu0 0.0
    %98 = vmatpush1.msra.mxu0 0.0
    %99 = vmatprep.subr.mxu0 0.0
    %100 = vmatpush1.msra.mxu0 0.0
    %101 = vmatprep.subr.mxu0 0.0
    %102 = vmatpush1.msra.mxu0 0.0
    %103 = vmatprep.subr.mxu0 0.0
    %104 = vmatpush1.msra.mxu0 0.0
    %105 = vmatprep.subr.mxu0 0.0
    %106 = vmatpush1.msra.mxu0 0.0
    %107 = vmatprep.subr.mxu0 0.0
    %108 = vmatpush1.msra.mxu0 0.0
    %109 = vmatprep.subr.mxu0 0.0
    %110 = vmatpush1.msra.mxu0 0.0
    %111 = vmatprep.subr.mxu0 0.0
    %112 = vmatpush1.msra.mxu0 0.0
    %113 = vmatprep.subr.mxu0 0.0
    %114 = vmatpush1.msra.mxu0 0.0
    %115 = vmatprep.subr.mxu0 0.0
    %116 = vmatpush1.msra.mxu0 0.0
    %117 = vmatprep.subr.mxu0 0.0
    %118 = vmatpush1.msra.mxu0 0.0
    %119 = vmatprep.subr.mxu0 0.0
    %120 = vmatpush1.msra.mxu0 0.0
    %121 = vmatprep.subr.mxu0 0.0
    %122 = vmatpush1.msra.mxu0 0.0
    %123 = vmatprep.subr.mxu0 0.0
    %124 = vmatpush1.msra.mxu0 0.0
    %125 = vmatprep.subr.mxu0 0.0
    %126 = vmatpush1.msra.mxu0 0.0
    %127 = vmatprep.subr.mxu0 0.0
    %128 = vmatpush1.msra.mxu0 0.0
    %129 = vmatprep.subr.mxu0 0.0
    %130 = vmatpush1.msra.mxu0 0.0
    %131 = vmatprep.subr.mxu0 0.0
    %132 = vmatpush1.msra.mxu0 0.0
    %133 = vmatprep.mubr.f32.mxu0 0.0
    %134 = vmatmul.mubr.f32.gmra.mrb[0].mxu0 %v58
    %v135 = vpop.f32.mrb[0].mxu0
    %v136 = vadd.f32 %v39, %v135
    %v137 = vpop.f32.mrb[0].mxu0
    %v138 = vadd.f32 %v39, %v137
    %139 = vmatprep.mubr.f32.mxu0 0.0
    %140 = vmatmul.mubr.f32.gmra.mrb[0].mxu0 %v61
    %v141 = vpop.f32.mrb[0].mxu0
    %v142 = vadd.f32 %v44, %v141
    %v143 = vpop.f32.mrb[0].mxu0
    %v144 = vadd.f32 %v44, %v143
    %145 = vmatprep.mubr.f32.mxu0 0.0
    %146 = vmatmul.mubr.f32.gmra.mrb[0].mxu0 %v64
    %v147 = vpop.f32.mrb[0].mxu0
    %v148 = vadd.f32 %v49, %v147
    %v149 = vpop.f32.mrb[0].mxu0
    %v150 = vadd.f32 %v49, %v149
    %151 = vmatprep.mubr.f32.mxu0 0.0
    %152 = vmatmul.mubr.f32.gmra.mrb[0].mxu0 %v67
    %v153 = vpop.f32.mrb[0].mxu0
    %v154 = vadd.f32 %v54, %v153
    %v155 = vpop.f32.mrb[0].mxu0
    %v156 = vadd.f32 %v54, %v155
    %157 = vdwg.mxu0
    %v158 = vmax.f32 %v136, 0.0
    %v159 = vmax.f32 %v138, 0.0
    %v160 = vmax.f32 %v142, 0.0
    %v161 = vmax.f32 %v144, 0.0
    %v162 = vmax.f32 %v148, 0.0
    %v163 = vmax.f32 %v150, 0.0
    %v164 = vmax.f32 %v154, 0.0
    %v165 = vmax.f32 %v156, 0.0
    %167 = vset.pattern.permute.xlu0 0
    %168 = vperm.xlu0 %167, %v31
    %v169 = vpop.permute.xlu0 %168
    %172 = vset.pattern.permute.xlu0 0
    %173 = vperm.xlu0 %172, %v32
    %v174 = vpop.permute.xlu0 %173
    %177 = vset.pattern.permute.xlu0 0
    %178 = vperm.xlu0 %177, %v33
    %v179 = vpop.permute.xlu0 %178
    %182 = vset.pattern.permute.xlu0 0
    %183 = vperm.xlu0 %182, %v34
    %v184 = vpop.permute.xlu0 %183
    %vm186 = vcmask 261120
    %v188 = vsel %vm186, %v22, 0
    %v191 = vsel %vm186, %v23, 0
    %v194 = vsel %vm186, %v24, 0
    %v197 = vsel %vm186, %v25, 0
    %199 = vmatprep.subr.mxu0 %v159
    %200 = vmatpush1.msra.mxu0 %v158
    %201 = vmatprep.subr.mxu0 %v161
    %202 = vmatpush1.msra.mxu0 %v160
    %203 = vmatprep.subr.mxu0 %v163
    %204 = vmatpush1.msra.mxu0 %v162
    %205 = vmatprep.subr.mxu0 %v165
    %206 = vmatpush1.msra.mxu0 %v164
    %207 = vmatprep.subr.mxu0 0.0
    %208 = vmatpush1.msra.mxu0 0.0
    %209 = vmatprep.subr.mxu0 0.0
    %210 = vmatpush1.msra.mxu0 0.0
    %211 = vmatprep.subr.mxu0 0.0
    %212 = vmatpush1.msra.mxu0 0.0
    %213 = vmatprep.subr.mxu0 0.0
    %214 = vmatpush1.msra.mxu0 0.0
    %215 = vmatprep.subr.mxu0 0.0
    %216 = vmatpush1.msra.mxu0 0.0
    %217 = vmatprep.subr.mxu0 0.0
    %218 = vmatpush1.msra.mxu0 0.0
    %219 = vmatprep.subr.mxu0 0.0
    %220 = vmatpush1.msra.mxu0 0.0
    %221 = vmatprep.subr.mxu0 0.0
    %222 = vmatpush1.msra.mxu0 0.0
    %223 = vmatprep.subr.mxu0 0.0
    %224 = vmatpush1.msra.mxu0 0.0
    %225 = vmatprep.subr.mxu0 0.0
    %226 = vmatpush1.msra.mxu0 0.0
    %227 = vmatprep.subr.mxu0 0.0
    %228 = vmatpush1.msra.mxu0 0.0
    %229 = vmatprep.subr.mxu0 0.0
    %230 = vmatpush1.msra.mxu0 0.0
    %231 = vmatprep.subr.mxu0 0.0
    %232 = vmatpush1.msra.mxu0 0.0
    %233 = vmatprep.subr.mxu0 0.0
    %234 = vmatpush1.msra.mxu0 0.0
    %235 = vmatprep.subr.mxu0 0.0
    %236 = vmatpush1.msra.mxu0 0.0
    %237 = vmatprep.subr.mxu0 0.0
    %238 = vmatpush1.msra.mxu0 0.0
    %239 = vmatprep.subr.mxu0 0.0
    %240 = vmatpush1.msra.mxu0 0.0
    %241 = vmatprep.subr.mxu0 0.0
    %242 = vmatpush1.msra.mxu0 0.0
    %243 = vmatprep.subr.mxu0 0.0
    %244 = vmatpush1.msra.mxu0 0.0
    %245 = vmatprep.subr.mxu0 0.0
    %246 = vmatpush1.msra.mxu0 0.0
    %247 = vmatprep.subr.mxu0 0.0
    %248 = vmatpush1.msra.mxu0 0.0
    %249 = vmatprep.subr.mxu0 0.0
    %250 = vmatpush1.msra.mxu0 0.0
    %251 = vmatprep.subr.mxu0 0.0
    %252 = vmatpush1.msra.mxu0 0.0
    %253 = vmatprep.subr.mxu0 0.0
    %254 = vmatpush1.msra.mxu0 0.0
    %255 = vmatprep.subr.mxu0 0.0
    %256 = vmatpush1.msra.mxu0 0.0
    %257 = vmatprep.subr.mxu0 0.0
    %258 = vmatpush1.msra.mxu0 0.0
    %259 = vmatprep.subr.mxu0 0.0
    %260 = vmatpush1.msra.mxu0 0.0
    %261 = vmatprep.subr.mxu0 0.0
    %262 = vmatpush1.msra.mxu0 0.0
    %263 = vmatprep.mubr.f32.mxu0 0.0
    %264 = vmatmul.mubr.f32.gmra.mrb[0].mxu0 %v188
    %v265 = vpop.f32.mrb[0].mxu0
    %v266 = vadd.f32 %v169, %v265
    %v267 = vpop.f32.mrb[0].mxu0
    %v268 = vadd.f32 %v169, %v267
    %269 = vmatprep.mubr.f32.mxu0 0.0
    %270 = vmatmul.mubr.f32.gmra.mrb[0].mxu0 %v191
    %v271 = vpop.f32.mrb[0].mxu0
    %v272 = vadd.f32 %v174, %v271
    %v273 = vpop.f32.mrb[0].mxu0
    %v274 = vadd.f32 %v174, %v273
    %275 = vmatprep.mubr.f32.mxu0 0.0
    %276 = vmatmul.mubr.f32.gmra.mrb[0].mxu0 %v194
    %v277 = vpop.f32.mrb[0].mxu0
    %v278 = vadd.f32 %v179, %v277
    %v279 = vpop.f32.mrb[0].mxu0
    %v280 = vadd.f32 %v179, %v279
    %281 = vmatprep.mubr.f32.mxu0 0.0
    %282 = vmatmul.mubr.f32.gmra.mrb[0].mxu0 %v197
    %v283 = vpop.f32.mrb[0].mxu0
    %v284 = vadd.f32 %v184, %v283
    %v285 = vpop.f32.mrb[0].mxu0
    %v286 = vadd.f32 %v184, %v285
    %287 = vdwg.mxu0
    %v288 = vmax.f32 %v266, 0.0
    %v289 = vmax.f32 %v268, 0.0
    %v290 = vmax.f32 %v272, 0.0
    %v291 = vmax.f32 %v274, 0.0
    %v292 = vmax.f32 %v278, 0.0
    %v293 = vmax.f32 %v280, 0.0
    %v294 = vmax.f32 %v284, 0.0
    %v295 = vmax.f32 %v286, 0.0
    %297 = vset.pattern.permute.xlu0 0
    %298 = vperm.xlu0 %297, %v35
    %v299 = vpop.permute.xlu0 %298
    %v302 = vsel %vm186, %v26, 0
    %304 = vmatprep.subr.mxu0 %v289
    %305 = vmatpush1.msra.mxu0 %v288
    %306 = vmatprep.subr.mxu0 %v291
    %307 = vmatpush1.msra.mxu0 %v290
    %308 = vmatprep.subr.mxu0 %v293
    %309 = vmatpush1.msra.mxu0 %v292
    %310 = vmatprep.subr.mxu0 %v295
    %311 = vmatpush1.msra.mxu0 %v294
    %312 = vmatprep.subr.mxu0 0.0
    %313 = vmatpush1.msra.mxu0 0.0
    %314 = vmatprep.subr.mxu0 0.0
    %315 = vmatpush1.msra.mxu0 0.0
    %316 = vmatprep.subr.mxu0 0.0
    %317 = vmatpush1.msra.mxu0 0.0
    %318 = vmatprep.subr.mxu0 0.0
    %319 = vmatpush1.msra.mxu0 0.0
    %320 = vmatprep.subr.mxu0 0.0
    %321 = vmatpush1.msra.mxu0 0.0
    %322 = vmatprep.subr.mxu0 0.0
    %323 = vmatpush1.msra.mxu0 0.0
    %324 = vmatprep.subr.mxu0 0.0
    %325 = vmatpush1.msra.mxu0 0.0
    %326 = vmatprep.subr.mxu0 0.0
    %327 = vmatpush1.msra.mxu0 0.0
    %328 = vmatprep.subr.mxu0 0.0
    %329 = vmatpush1.msra.mxu0 0.0
    %330 = vmatprep.subr.mxu0 0.0
    %331 = vmatpush1.msra.mxu0 0.0
    %332 = vmatprep.subr.mxu0 0.0
    %333 = vmatpush1.msra.mxu0 0.0
    %334 = vmatprep.subr.mxu0 0.0
    %335 = vmatpush1.msra.mxu0 0.0
    %336 = vmatprep.subr.mxu0 0.0
    %337 = vmatpush1.msra.mxu0 0.0
    %338 = vmatprep.subr.mxu0 0.0
    %339 = vmatpush1.msra.mxu0 0.0
    %340 = vmatprep.subr.mxu0 0.0
    %341 = vmatpush1.msra.mxu0 0.0
    %342 = vmatprep.subr.mxu0 0.0
    %343 = vmatpush1.msra.mxu0 0.0
    %344 = vmatprep.subr.mxu0 0.0
    %345 = vmatpush1.msra.mxu0 0.0
    %346 = vmatprep.subr.mxu0 0.0
    %347 = vmatpush1.msra.mxu0 0.0
    %348 = vmatprep.subr.mxu0 0.0
    %349 = vmatpush1.msra.mxu0 0.0
    %350 = vmatprep.subr.mxu0 0.0
    %351 = vmatpush1.msra.mxu0 0.0
    %352 = vmatprep.subr.mxu0 0.0
    %353 = vmatpush1.msra.mxu0 0.0
    %354 = vmatprep.subr.mxu0 0.0
    %355 = vmatpush1.msra.mxu0 0.0
    %356 = vmatprep.subr.mxu0 0.0
    %357 = vmatpush1.msra.mxu0 0.0
    %358 = vmatprep.subr.mxu0 0.0
    %359 = vmatpush1.msra.mxu0 0.0
    %360 = vmatprep.subr.mxu0 0.0
    %361 = vmatpush1.msra.mxu0 0.0
    %362 = vmatprep.subr.mxu0 0.0
    %363 = vmatpush1.msra.mxu0 0.0
    %364 = vmatprep.subr.mxu0 0.0
    %365 = vmatpush1.msra.mxu0 0.0
    %366 = vmatprep.subr.mxu0 0.0
    %367 = vmatpush1.msra.mxu0 0.0
    %368 = vmatprep.mubr.f32.mxu0 0.0
    %369 = vmatmul.mubr.f32.gmra.mrb[0].mxu0 %v302
    %v370 = vpop.f32.mrb[0].mxu0
    %v371 = vadd.f32 %v299, %v370
    %v372 = vpop.f32.mrb[0].mxu0
    %v373 = vadd.f32 %v299, %v372
    %374 = vdwg.mxu0
    %v375 = vmax.f32 %v371, -20.0
    %v376 = vmax.f32 %v373, -20.0
    %v377 = vmin.f32 %v375, 2.0
    %v378 = vmin.f32 %v376, 2.0
    %v379 = vmul.f32 %v377, 1.442695
    %v380 = vpow.pop %v379
    %v381 = vmul.f32 %v378, 1.442695
    %v382 = vpow.pop %v381
    %v384 = vcombine.low %v17, %v17
    %v386 = vmul.f32 %v380, %v384
    %v387 = vmul.f32 %v382, %v17
    %v390 = vrot.slane %v386, 4
    %v391 = vrot.slane %v387, 4
    %v394 = vadd.f32 %v371, %v390
    %v395 = vadd.f32 %v373, %v391
    %v396 = vmul.f32 %v17, -0.5
    %v397 = vmul.f32 %v396, %v17
    %v400 = vcombine.high %v377, %v378
    %v402 = vsub.f32 %v397, %v400
    %v404 = vcombine.high %v402, %v402
    %vm406 = vcmask 1043456
    %v407 = vsel %vm406, %v402, 0.0
    %v408 = vrot.slane %v407, 4
    %v409 = vadd.f32 %v407, %v408
    %v410 = vrot.slane %v409, 2
    %v411 = vadd.f32 %v409, %v410
    %v412 = vrot.slane %v411, 1
    %v413 = vadd.f32 %v411, %v412
    %v414 = vsel %vm406, %v404, 0.0
    %v415 = vrot.slane %v414, 4
    %v416 = vadd.f32 %v414, %v415
    %v417 = vrot.slane %v416, 2
    %v418 = vadd.f32 %v416, %v417
    %v419 = vrot.slane %v418, 1
    %v420 = vadd.f32 %v418, %v419
    %v421 = vsub.f32 %v413, 3.675754
    %v422 = vsub.f32 %v420, 3.675754
    %v423 = vmul.f32 %v394, -2.0
    %v424 = vmul.f32 %v395, -2.0
    %v425 = vmax.f32 %v423, 0.0
    %v426 = vmax.f32 %v424, 0.0
    %v427 = vand.u32 2147483647, %v423
    %v428 = vand.u32 2147483647, %v424
    %v429 = vsub.f32 0.0, %v427
    %v430 = vsub.f32 0.0, %v428
    %v431 = vmul.f32 %v429, 1.442695
    %v432 = vpow.pop %v431
    %v433 = vmul.f32 %v430, 1.442695
    %v434 = vpow.pop %v433
    %v435 = vadd.f32 %v432, 1.0
    %v436 = vlog2.pop %v435
    %v437 = vmul.f32 %v436, 0.6931472
    %v438 = vmul.f32 -0.5, %v432
    %v439 = vadd.f32 %v438, 1.0
    %v440 = vmul.f32 %v439, %v432
    %v441 = vand.u32 2147483647, %v432
    %vm442 = vcmp.lt.f32.partialorder %v441, 0.0004427343
    %v443 = vsel %vm442, %v440, %v437
    %v444 = vadd.f32 %v434, 1.0
    %v445 = vlog2.pop %v444
    %v446 = vmul.f32 %v445, 0.6931472
    %v447 = vmul.f32 -0.5, %v434
    %v448 = vadd.f32 %v447, 1.0
    %v449 = vmul.f32 %v448, %v434
    %v450 = vand.u32 2147483647, %v434
    %vm451 = vcmp.lt.f32.partialorder %v450, 0.0004427343
    %v452 = vsel %vm451, %v449, %v446
    %v453 = vadd.f32 %v425, %v443
    %v454 = vadd.f32 %v426, %v452
    %v455 = vsub.f32 0.6931472, %v394
    %v456 = vsub.f32 0.6931472, %v395
    %v457 = vsub.f32 %v455, %v453
    %v458 = vsub.f32 %v456, %v454
    %v459 = vmul.f32 %v457, 2.0
    %v460 = vmul.f32 %v458, 2.0
    %v461 = vsel %vm406, %v459, 0.0
    %v462 = vrot.slane %v461, 4
    %v463 = vadd.f32 %v461, %v462
    %v464 = vrot.slane %v463, 2
    %v465 = vadd.f32 %v463, %v464
    %v466 = vrot.slane %v465, 1
    %v467 = vadd.f32 %v465, %v466
    %v468 = vsel %vm406, %v460, 0.0
    %v469 = vrot.slane %v468, 4
    %v470 = vadd.f32 %v468, %v469
    %v471 = vrot.slane %v470, 2
    %v472 = vadd.f32 %v470, %v471
    %v473 = vrot.slane %v472, 1
    %v474 = vadd.f32 %v472, %v473
    %v475 = vsub.f32 %v421, %v467
    %v476 = vsub.f32 %v422, %v474
    %v477 = vtanh.pop %v394
    %v478 = vtanh.pop %v395
    %v479 = vmul.f32 %v477, 2.0
    %v480 = vmul.f32 %v478, 2.0
    %481 = vst [vmem:[#allocation2] sm:$0xf] %v479
    %482 = vst [vmem:[#allocation2 + $0x8] sm:$0xf] %v480
    %v483 = vtanh.pop %v371
    %v484 = vtanh.pop %v373
    %v487 = vrot.slane %v483, 4
    %v488 = vrot.slane %v484, 4
    %491 = vst [vmem:[#allocation2] sm:$0xf0] %v487
    %492 = vst [vmem:[#allocation2 + $0x8] sm:$0xf0] %v488
    %v495 = vrot.slane %v380, 4
    %v496 = vrot.slane %v382, 4
    %499 = vst [vmem:[#allocation2 + $0x10] sm:$0xf] %v495
    %500 = vst [vmem:[#allocation2 + $0x18] sm:$0xf] %v496
    %v503 = vcombine.low %v475, %v476
    %v505 = vunpack.c.l.s4 1966171168
    %v506 = vunpack.c.0.s8 %v505
    %v507 = vlaneseq
    %v508 = vshrl.u32 %v507, 7
    %v509 = vsub.s32 %v506, %v508
    %v510 = vrot.slane %v503, %v509
    %v512 = vunpack.c.l.s4 1966171168
    %v513 = vunpack.c.0.s8 %v512
    %v514 = vlaneseq
    %v515 = vshrl.u32 %v514, 7
    %v516 = vsub.s32 %v513, %v515
    %v517 = vrot.slane %v510, %v516
    %v519 = vlaneseq
    %vm520 = vcmp.ge.s32.totalorder %v519, 0
    %vm521 = vcmp.lt.s32.totalorder %v519, 256
    %vm522 = vmand %vm520, %vm521
    %s523 = scalar_lea.vmem [#allocation2], 20
    %524 = vst.msk [vmem:[%s523] ss:$8 sm:$0x3] %vm522, %v517
    %525 = vst.msk [vmem:[%s523] ss:$8 sm:$0x0] %vm522, %v517
    // Predicated region
    $region14: #{tpu_custom_call.1} parent=1 // pred_check
      _
    $region15: #{tpu_custom_call.1} parent=1 // pred_check_branch
      %527 = sbr.rel (0) target = $region17
    $region16: #{tpu_custom_call.1} parent=1 // pred_region
      %s529 = ssub.s32 512, 512
      %530 = vsyncadd [#allocation3], %s529
      %s531 = sshll.u32 [#allocation2], 4
      %s532 = int_to_ptr.vmem [resolvable:$true] %s531
      %537 = dma.vmem_to_hbm [thread:$0]  %s532, 512, %s3, [#allocation3], 256, 256, 16
    $region17: #{tpu_custom_call.1} parent=1 // pred_fallthru
      _
    // Predicated region
    $region18: #{tpu_custom_call.1} parent=1 // pred_check
      _
    $region19: #{tpu_custom_call.1} parent=1 // pred_check_branch
      %539 = sbr.rel (0) target = $region21
    $region20: #{tpu_custom_call.1} parent=1 // pred_region
      %540 = dma.done [#allocation3], 512
    $region21: #{tpu_custom_call.1} parent=1 // pred_fallthru
      _
    %541 = vsyncpa [#allocation3], 1

</llo_original>
